<compile_context>
chip_gen: v6e
topology: v6e:2x2x1
jax: 0.10.0
libtpu: 0.0.40
codegen_flags: <defaults>
</compile_context>

<pallas_src>
import jax
import jax.numpy as jnp
from jax.experimental import pallas as pl
from jax.experimental.pallas import tpu as pltpu


def temporal_conv_kernel(w_ref, b_ref, x_ref, out_ref):
    """w_ref: (3, T*Cin, Tp*Cout)   [0]=conv1 ("temp"), [1]=x_p, [2]=x_q
       b_ref: (3, 1, Tp*Cout)
       x_ref: (1, N, T*Cin)         one batch element's flattened (T, Cin) slab
       out_ref: (1, N, Tp*Cout)
    """
    x = x_ref[0]                                                            # (N, T*Cin)

    temp = jnp.dot(x, w_ref[0], preferred_element_type=jnp.float32) + b_ref[0]
    x_p = jnp.dot(x, w_ref[1], preferred_element_type=jnp.float32) + b_ref[1]
    x_q = jnp.dot(x, w_ref[2], preferred_element_type=jnp.float32) + b_ref[2]

    out_ref[0] = ((x_p + temp) * jax.nn.sigmoid(x_q)).astype(out_ref.dtype)


@jax.jit
def temporal_conv(X, w1, b1, wc, bc):
    """X: (B, N, T, Cin); w1: (Cout, Cin, 1, k); b1: (Cout,);
       wc: (2*Cout, Cin, 1, k); bc: (2*Cout,).  Returns (B, N, T-k+1, Cout)."""
    B, N, T, C_in = X.shape
    C_out = w1.shape[0]
    k = w1.shape[-1]
    Tp = T - k + 1

    # ---- hoisted, grid-invariant weight preprocessing (runs once per call) ----
    def banded(w):
        # (O, Cin, 1, k) -> Toeplitz matrix (T*Cin, Tp*O) implementing the VALID
        # 1-D conv along T (cross-correlation, matching nn.Conv2d).
        O = w.shape[0]
        wt = jnp.transpose(w[:, :, 0, :], (2, 1, 0))            # (k, Cin, O)
        cols = []
        for tp in range(Tp):                                     # static, tiny loop
            col = jnp.zeros((T, C_in, O), w.dtype).at[tp:tp + k].set(wt)
            cols.append(col.reshape(T * C_in, O))
        return jnp.concatenate(cols, axis=1)                     # (T*Cin, Tp*O)

    W = jnp.stack([banded(w1), banded(wc[:C_out]), banded(wc[C_out:])])   # (3, T*Cin, Tp*Cout)
    bias = jnp.stack([jnp.tile(b1, Tp),
                      jnp.tile(bc[:C_out], Tp),
                      jnp.tile(bc[C_out:], Tp)])[:, None, :]              # (3, 1, Tp*Cout)

    X2 = X.reshape(B, N, T * C_in)            # free row-major reshape (no transpose)

    out = pl.pallas_call(
        temporal_conv_kernel,
        out_shape=jax.ShapeDtypeStruct((B, N, Tp * C_out), X.dtype),
        grid=(B,),
        in_specs=[
            pl.BlockSpec((3, T * C_in, Tp * C_out), lambda b: (0, 0, 0)),  # W (resident)
            pl.BlockSpec((3, 1, Tp * C_out), lambda b: (0, 0, 0)),         # bias (resident)
            pl.BlockSpec((1, N, T * C_in), lambda b: (b, 0, 0)),           # X slab
        ],
        out_specs=pl.BlockSpec((1, N, Tp * C_out), lambda b: (b, 0, 0)),
        compiler_params=pltpu.CompilerParams(
            dimension_semantics=("parallel",)),
    )(W, bias, X2)

    return out.reshape(B, N, Tp, C_out)       # free row-major reshape back


def reference(X, w1, b1, wc, bc):
    """Pure-JAX mirror of the PyTorch forward (via lax.conv), for verification."""
    C_out = w1.shape[0]
    Xp = jnp.transpose(X, (0, 3, 1, 2))                          # (B, Cin, N, T)
    dn = ("NCHW", "OIHW", "NCHW")
    causal = jax.lax.conv_general_dilated(Xp, wc, (1, 1), "VALID",
                                          dimension_numbers=dn) + bc[None, :, None, None]
    temp = jax.lax.conv_general_dilated(Xp, w1, (1, 1), "VALID",
                                        dimension_numbers=dn) + b1[None, :, None, None]
    x_p = causal[:, :C_out]
    x_q = causal[:, -C_out:]
    out = (x_p + temp) * jax.nn.sigmoid(x_q)
    return jnp.transpose(out, (0, 2, 3, 1))                      # (B, N, Tp, Cout)


if __name__ == "__main__":
    # Small deterministic shapes: batch=2, spatial nodes=16, seq=8, Cin=4, Cout=32, k=3.
    B, N, T = 2, 16, 8
    C_in, C_out, k = 4, 32, 3
    Tp = T - k + 1

    key = jax.random.PRNGKey(0)
    ks = iter(jax.random.split(key, 8))

    X = jax.random.normal(next(ks), (B, N, T, C_in), jnp.float32)

    # Conv parameters (PyTorch Conv2d layout: (out_ch, in_ch, 1, k)); deterministic init.
    stdv = 1.0 / ((C_in * k) ** 0.5)
    w1 = jax.random.uniform(next(ks), (C_out, C_in, 1, k), jnp.float32, -stdv, stdv)
    b1 = jax.random.uniform(next(ks), (C_out,), jnp.float32, -stdv, stdv)
    wc = jax.random.uniform(next(ks), (2 * C_out, C_in, 1, k), jnp.float32, -stdv, stdv)
    bc = jax.random.uniform(next(ks), (2 * C_out,), jnp.float32, -stdv, stdv)

    # TODO(synk): conv2 / conv3 from the PyTorch module are unused in forward and omitted.

    out = temporal_conv(X, w1, b1, wc, bc)
    out = jax.block_until_ready(out)

    ref = reference(X, w1, b1, wc, bc)
    assert out.shape == (B, N, Tp, C_out), out.shape
    assert jnp.allclose(out, ref, atol=1e-5, rtol=1e-5), "mismatch vs reference"

    print("KERNEL_OK")
</pallas_src>

<mosaic_0001>
module attributes {stable_mosaic.version = 11 : i64} {
  func.func @temporal_conv_kernel(%arg0: i32, %arg1: memref<3x32x192xf32, #tpu.memory_space<vmem>>, %arg2: memref<3x1x192xf32, #tpu.memory_space<vmem>>, %arg3: memref<1x16x32xf32, #tpu.memory_space<vmem>>, %arg4: memref<1x16x192xf32, #tpu.memory_space<vmem>>) attributes {dimension_semantics = [#tpu.dimension_semantics<parallel>], iteration_bounds = array<i64: 2>, scalar_prefetch = 0 : i64, scratch_operands = 0 : i64, tpu.core_type = #tpu.core_type<tc>, window_params = [{pipeline_mode = #tpu.pipeline_mode<synchronous>, transform_indices = @transform_0, window_bounds = array<i64: 3, 32, 192>}, {pipeline_mode = #tpu.pipeline_mode<synchronous>, transform_indices = @transform_1, window_bounds = array<i64: 3, 1, 192>}, {transform_indices = @transform_2, window_bounds = array<i64: 1, 16, 32>}, {transform_indices = @transform_3, window_bounds = array<i64: 1, 16, 192>}]} {
    %c0 = arith.constant 0 : index
    %c0_0 = arith.constant 0 : index
    %c0_1 = arith.constant 0 : index
    %0 = vector.load %arg3[%c0, %c0_0, %c0_1] : memref<1x16x32xf32, #tpu.memory_space<vmem>>, vector<1x16x32xf32>
    %1 = vector.shape_cast %0 : vector<1x16x32xf32> to vector<16x32xf32>
    %c0_2 = arith.constant 0 : index
    %c0_3 = arith.constant 0 : index
    %c0_4 = arith.constant 0 : index
    %2 = vector.load %arg1[%c0_2, %c0_3, %c0_4] : memref<3x32x192xf32, #tpu.memory_space<vmem>>, vector<1x32x192xf32>
    %3 = vector.shape_cast %2 : vector<1x32x192xf32> to vector<32x192xf32>
    %cst = arith.constant dense<0.000000e+00> : vector<16x192xf32>
    %4 = tpu.matmul %1, %3, %cst {dimension_numbers = #tpu.dot_dimension_numbers<[1], [0], [0], [1], [0, 0, 1, 1], [], []>} : vector<16x32xf32>, vector<32x192xf32>, vector<16x192xf32> -> vector<16x192xf32>
    %c0_5 = arith.constant 0 : index
    %c0_6 = arith.constant 0 : index
    %c0_7 = arith.constant 0 : index
    %5 = vector.load %arg2[%c0_5, %c0_6, %c0_7] : memref<3x1x192xf32, #tpu.memory_space<vmem>>, vector<1x1x192xf32>
    %6 = vector.shape_cast %5 : vector<1x1x192xf32> to vector<1x192xf32>
    %7 = vector.broadcast %6 : vector<1x192xf32> to vector<16x192xf32>
    %8 = arith.addf %4, %7 : vector<16x192xf32>
    %c1 = arith.constant 1 : index
    %c0_8 = arith.constant 0 : index
    %c0_9 = arith.constant 0 : index
    %9 = vector.load %arg1[%c1, %c0_8, %c0_9] : memref<3x32x192xf32, #tpu.memory_space<vmem>>, vector<1x32x192xf32>
    %10 = vector.shape_cast %9 : vector<1x32x192xf32> to vector<32x192xf32>
    %cst_10 = arith.constant dense<0.000000e+00> : vector<16x192xf32>
    %11 = tpu.matmul %1, %10, %cst_10 {dimension_numbers = #tpu.dot_dimension_numbers<[1], [0], [0], [1], [0, 0, 1, 1], [], []>} : vector<16x32xf32>, vector<32x192xf32>, vector<16x192xf32> -> vector<16x192xf32>
    %c1_11 = arith.constant 1 : index
    %c0_12 = arith.constant 0 : index
    %c0_13 = arith.constant 0 : index
    %12 = vector.load %arg2[%c1_11, %c0_12, %c0_13] : memref<3x1x192xf32, #tpu.memory_space<vmem>>, vector<1x1x192xf32>
    %13 = vector.shape_cast %12 : vector<1x1x192xf32> to vector<1x192xf32>
    %14 = vector.broadcast %13 : vector<1x192xf32> to vector<16x192xf32>
    %15 = arith.addf %11, %14 : vector<16x192xf32>
    %c2 = arith.constant 2 : index
    %c0_14 = arith.constant 0 : index
    %c0_15 = arith.constant 0 : index
    %16 = vector.load %arg1[%c2, %c0_14, %c0_15] : memref<3x32x192xf32, #tpu.memory_space<vmem>>, vector<1x32x192xf32>
    %17 = vector.shape_cast %16 : vector<1x32x192xf32> to vector<32x192xf32>
    %cst_16 = arith.constant dense<0.000000e+00> : vector<16x192xf32>
    %18 = tpu.matmul %1, %17, %cst_16 {dimension_numbers = #tpu.dot_dimension_numbers<[1], [0], [0], [1], [0, 0, 1, 1], [], []>} : vector<16x32xf32>, vector<32x192xf32>, vector<16x192xf32> -> vector<16x192xf32>
    %c2_17 = arith.constant 2 : index
    %c0_18 = arith.constant 0 : index
    %c0_19 = arith.constant 0 : index
    %19 = vector.load %arg2[%c2_17, %c0_18, %c0_19] : memref<3x1x192xf32, #tpu.memory_space<vmem>>, vector<1x1x192xf32>
    %20 = vector.shape_cast %19 : vector<1x1x192xf32> to vector<1x192xf32>
    %21 = vector.broadcast %20 : vector<1x192xf32> to vector<16x192xf32>
    %22 = arith.addf %18, %21 : vector<16x192xf32>
    %23 = arith.addf %15, %8 : vector<16x192xf32>
    %24 = arith.negf %22 : vector<16x192xf32>
    %25 = math.exp %24 : vector<16x192xf32>
    %cst_20 = arith.constant 1.000000e+00 : f32
    %26 = vector.broadcast %cst_20 : f32 to vector<16x192xf32>
    %27 = arith.addf %26, %25 : vector<16x192xf32>
    %28 = arith.divf %26, %27 : vector<16x192xf32>
    %29 = arith.mulf %23, %28 : vector<16x192xf32>
    %c0_21 = arith.constant 0 : index
    %c0_22 = arith.constant 0 : index
    %c0_23 = arith.constant 0 : index
    %30 = vector.load %arg4[%c0_21, %c0_22, %c0_23] : memref<1x16x192xf32, #tpu.memory_space<vmem>>, vector<1x16x192xf32>
    %31 = vector.shape_cast %30 : vector<1x16x192xf32> to vector<16x192xf32>
    %32 = vector.shape_cast %29 : vector<16x192xf32> to vector<1x16x192xf32>
    tpu.vector_store %arg4[%c0_21, %c0_22, %c0_23], %32 {strides = array<i32>} : memref<1x16x192xf32, #tpu.memory_space<vmem>>, vector<1x16x192xf32>,
    return
  }
  func.func @transform_0(%arg0: i32) -> (i32, i32, i32) {
    %c0_i32 = arith.constant 0 : i32
    %c0_i32_0 = arith.constant 0 : i32
    %c0_i32_1 = arith.constant 0 : i32
    %c0_i32_2 = arith.constant 0 : i32
    return %c0_i32, %c0_i32_0, %c0_i32_1 : i32, i32, i32
  }
  func.func @transform_1(%arg0: i32) -> (i32, i32, i32) {
    %c0_i32 = arith.constant 0 : i32
    %c0_i32_0 = arith.constant 0 : i32
    %c0_i32_1 = arith.constant 0 : i32
    %c0_i32_2 = arith.constant 0 : i32
    return %c0_i32, %c0_i32_0, %c0_i32_1 : i32, i32, i32
  }
  func.func @transform_2(%arg0: i32) -> (i32, i32, i32) {
    %c0_i32 = arith.constant 0 : i32
    %c0_i32_0 = arith.constant 0 : i32
    %c0_i32_1 = arith.constant 0 : i32
    return %arg0, %c0_i32, %c0_i32_0 : i32, i32, i32
  }
  func.func @transform_3(%arg0: i32) -> (i32, i32, i32) {
    %c0_i32 = arith.constant 0 : i32
    %c0_i32_0 = arith.constant 0 : i32
    %c0_i32_1 = arith.constant 0 : i32
    return %arg0, %c0_i32, %c0_i32_0 : i32, i32, i32
  }
}

</mosaic_0001>

<llo_original>
// kernel: tile.22
$region0: #{tile.22}
  #allocation0 [shape = 's32[1]{0}', space=sflag, size = 0x4, scoped, tag = 'scoped memory for tile.22']
  %s0 = inlined_call_operand.vmem [shape: f32[32], index: 0, kind: input, shape index: {}]
  %s1 = inlined_call_operand.vmem [shape: f32[6,32], index: 1, kind: output, shape index: {}]
  // Predicated region
  $region2: #{tile.22} parent=0 // pred_check
    _
  $region3: #{tile.22} parent=0 // pred_check_branch
    %3 = sbr.rel (0) target = $region5
  $region4: #{tile.22} parent=0 // pred_region
    _
  $region5: #{tile.22} parent=0 // pred_fallthru
    _
  %v4 = vld [vmem:[%s0] ss:$0 sm:$0xff]
  %5 = vst [vmem:[%s1] sm:$0xff] %v4

// kernel: tile.28
$region0: #{tile.28}
  %s0 = inlined_call_operand.vmem [shape: f32[6,32], index: 0, kind: input, shape index: {}]
  %s1 = inlined_call_operand.vmem [shape: f32[1,192], index: 1, kind: output, shape index: {}]
  $region1: #{tile.28} parent=0
    #allocation0 [shape = 'u8[8192]{0}', space=vmem, size = 0x2000, scoped, tag = 'scoped mem for output reshape']
    %s2 = smov 3
    %v3 = vld [vmem:[%s0] ss:$4 sm:%s2]
    %vm4 = vcmask 261120
    %5 = vst.msk [vmem:[#allocation0] ss:$8 sm:$0x3] %vm4, %v3
    %s6 = scalar_lea.vmem %s0, 3
    %v7 = vld [vmem:[%s6] sm:$0x1]
    %8 = vrot.lane.b32.xlu0 %v7, 96
    %v9 = vpop.permute.xlu0 %8
    %vm10 = vcmask 1048320
    %11 = vst.msk [vmem:[#allocation0] sm:$0x1] %vm10, %v9
    %s12 = scalar_lea.vmem %s0, 2
    %v13 = vld [vmem:[%s12] sm:$0x1]
    %14 = vrot.lane.b32.xlu0 %v13, 64
    %v15 = vpop.permute.xlu0 %14
    %vm16 = vcmask 785920
    %17 = vst.msk [vmem:[#allocation0] sm:$0x1] %vm16, %v15
    %s18 = scalar_lea.vmem %s0, 1
    %s19 = smov 3
    %v20 = vld [vmem:[%s18] ss:$4 sm:%s19]
    %21 = vrot.lane.b32.xlu0 %v20, 32
    %v22 = vpop.permute.xlu0 %21
    %vm23 = vcmask 523520
    %24 = vst.msk [vmem:[#allocation0] ss:$8 sm:$0x3] %vm23, %v22
    %s26 = sshll.u32 1, 1
    %s27 = ssub.s32 %s26, 1
    %v29 = vld [vmem:[#allocation0] sm:%s27]
    %s30 = sshll.u32 1, 1
    %s31 = ssub.s32 %s30, 1
    %32 = vst [vmem:[%s1] sm:%s31] %v29
    %s33 = scalar_lea.vmem [#allocation0], 8
    %v34 = vld [vmem:[%s33] sm:%s27]
    %s35 = sshll.u32 1, 1
    %s36 = ssub.s32 %s35, 1
    %s37 = scalar_lea.vmem %s1, 1
    %38 = vst [vmem:[%s37] sm:%s36] %v34

// kernel: temporal_conv.1
$region0: #{temporal_conv.1}
  #allocation0 [shape = 'u32[]', space=smem, size = 0x4, offset = 0x4, fixed_abs, tag = 'smem constant byte address 0x4 - core index']
  #allocation1 [shape = 'u32[144,128]{1,0:T(1,128)}', space=vmem, size = 0x12000, scoped, tag = 'internal scratch']
  %s0 = inlined_call_operand.vmem [shape: f32[3,32,192], index: 0, kind: input, shape index: {}]
  %s1 = inlined_call_operand.vmem [shape: f32[3,1,192], index: 1, kind: input, shape index: {}]
  %s2 = inlined_call_operand.vmem [shape: f32[2,16,32], index: 2, kind: input, shape index: {}]
  %s3 = inlined_call_operand.vmem [shape: f32[2,16,192], index: 3, kind: output, shape index: {}]
  %s4 = sld [smem:[#allocation0]]
  $region45: #{temporal_conv.1} parent=0
    _
  %s6 = ssub.s32 1, %s4
  %s7 = scalar_select 0, %s6, %s4
  loop: start=0, step=1, limit=4
  $region2: #{temporal_conv.1} parent=0 // loop_pre_header
    _
  $region3: #{temporal_conv.1} parent=0 // loop_header
    %s9 = sphi 0, %s13
    %p10 = scmp.ge.s32.totalorder %s9, 4
    %s17 = sphi 0, %s17
    %s19 = sphi 0, %s17
    %s20 = sphi 0, %s19
    %s34 = sphi 0, %s20
    %s38 = sphi 0, %s38
    %s40 = sphi 0, %s38
    %s41 = sphi 0, %s40
    %s55 = sphi 0, %s41
    %s61 = sphi 0, %s63
    %s64 = sphi 0, %s61
    %s65 = sphi 0, %s64
    %s81 = sphi 0, %s65
    %s87 = sphi 0, %s89
    %s90 = sphi 0, %s87
    %s91 = sphi 0, %s90
    %s107 = sphi 0, %s91
  $region4: #{temporal_conv.1} parent=0 // loop_header_branch
    %12 = sbr.rel (%p10) target = $region8
  $region5: #{temporal_conv.1} parent=0 // loop_body
    %s14 = ssub.s32 %s9, 1
    %s15 = ssub.s32 %s9, 2
    %s16 = sadd.s32 %s9, 1
    %s18 = sadd.s32 %s17, 1
    %p21 = scmp.eq.s32.totalorder %s9, 1
    %p22 = scmp.ne.s32.totalorder %s17, %s19
    %p23 = scmp.eq.s32.totalorder %s9, 0
    %p24 = por %p22, %p23
    %p25 = scmp.ne.s32.totalorder %s17, %s19
    %p26 = scmp.eq.s32.totalorder %s14, 1
    %p27 = por %p25, %p26
    %p28 = scmp.ne.s32.totalorder %s19, %s20
    %p29 = scmp.eq.s32.totalorder %s14, 0
    %p30 = por %p28, %p29
    %p31 = scmp.ne.s32.totalorder %s19, %s20
    %p32 = scmp.eq.s32.totalorder %s15, 1
    %p33 = por %p31, %p32
    %p35 = scmp.ne.s32.totalorder %s20, %s34
    %p36 = scmp.eq.s32.totalorder %s15, 0
    %p37 = por %p35, %p36
    %s39 = sadd.s32 %s38, 1
    %p42 = scmp.eq.s32.totalorder %s9, 1
    %p43 = scmp.ne.s32.totalorder %s38, %s40
    %p44 = scmp.eq.s32.totalorder %s9, 0
    %p45 = por %p43, %p44
    %p46 = scmp.ne.s32.totalorder %s38, %s40
    %p47 = scmp.eq.s32.totalorder %s14, 1
    %p48 = por %p46, %p47
    %p49 = scmp.ne.s32.totalorder %s40, %s41
    %p50 = scmp.eq.s32.totalorder %s14, 0
    %p51 = por %p49, %p50
    %p52 = scmp.ne.s32.totalorder %s40, %s41
    %p53 = scmp.eq.s32.totalorder %s15, 1
    %p54 = por %p52, %p53
    %p56 = scmp.ne.s32.totalorder %s41, %s55
    %p57 = scmp.eq.s32.totalorder %s15, 0
    %p58 = por %p56, %p57
    %s59 = ssub.s32 %s9, %s16
    %p60 = scmp.eq.s32.totalorder %s59, 0
    %s62 = sadd.s32 %s61, 1
    %s63 = scalar_select %p60, %s61, %s62
    %p66 = pneg %p60
    %p67 = scmp.eq.s32.totalorder %s9, 1
    %p68 = por %p66, %p67
    %p69 = scmp.ne.s32.totalorder %s61, %s64
    %p70 = scmp.eq.s32.totalorder %s9, 0
    %p71 = por %p69, %p70
    %p72 = scmp.ne.s32.totalorder %s61, %s64
    %p73 = scmp.eq.s32.totalorder %s14, 1
    %p74 = por %p72, %p73
    %p75 = scmp.ne.s32.totalorder %s64, %s65
    %p76 = scmp.eq.s32.totalorder %s14, 0
    %p77 = por %p75, %p76
    %p78 = scmp.ne.s32.totalorder %s64, %s65
    %p79 = scmp.eq.s32.totalorder %s15, 1
    %p80 = por %p78, %p79
    %p82 = scmp.ne.s32.totalorder %s65, %s81
    %p83 = scmp.eq.s32.totalorder %s15, 0
    %p84 = por %p82, %p83
    %s85 = ssub.s32 %s9, %s16
    %p86 = scmp.eq.s32.totalorder %s85, 0
    %s88 = sadd.s32 %s87, 1
    %s89 = scalar_select %p86, %s87, %s88
    %p92 = pneg %p86
    %p93 = scmp.eq.s32.totalorder %s9, 1
    %p94 = por %p92, %p93
    %p95 = scmp.ne.s32.totalorder %s87, %s90
    %p96 = scmp.eq.s32.totalorder %s9, 0
    %p97 = por %p95, %p96
    %p98 = scmp.ne.s32.totalorder %s87, %s90
    %p99 = scmp.eq.s32.totalorder %s14, 1
    %p100 = por %p98, %p99
    %p101 = scmp.ne.s32.totalorder %s90, %s91
    %p102 = scmp.eq.s32.totalorder %s14, 0
    %p103 = por %p101, %p102
    %p104 = scmp.ne.s32.totalorder %s90, %s91
    %p105 = scmp.eq.s32.totalorder %s15, 1
    %p106 = por %p104, %p105
    %p108 = scmp.ne.s32.totalorder %s91, %s107
    %p109 = scmp.eq.s32.totalorder %s15, 0
    %p110 = por %p108, %p109
    %p111 = scmp.le.s32.totalorder 1, %s9
    %p112 = scmp.lt.s32.totalorder %s9, 3
    %p113 = pnand %p111, %p112
    %p114 = pneg %p113
    // Predicated region
    $region9: #{temporal_conv.1} parent=5 // pred_check
      _
    $region10: #{temporal_conv.1} parent=5 // pred_check_branch
      %116 = sbr.rel (%p113) target = $region12
    $region11: #{temporal_conv.1} parent=5 // pred_region
      %s117 = ssub.s32 %s9, 1
      // Predicated region
      $region13: #{temporal_conv.1} parent=11 // pred_check
        %p118 = pneg %p30
      $region14: #{temporal_conv.1} parent=11 // pred_check_branch
        %120 = sbr.rel (%p118) target = $region16
      $region15: #{temporal_conv.1} parent=11 // pred_region
        _
      $region16: #{temporal_conv.1} parent=11 // pred_fallthru
        _
      // Predicated region
      $region17: #{temporal_conv.1} parent=11 // pred_check
        %p121 = pneg %p51
      $region18: #{temporal_conv.1} parent=11 // pred_check_branch
        %123 = sbr.rel (%p121) target = $region20
      $region19: #{temporal_conv.1} parent=11 // pred_region
        _
      $region20: #{temporal_conv.1} parent=11 // pred_fallthru
        _
    $region12: #{temporal_conv.1} parent=5 // pred_fallthru
      _
    %p124 = scmp.lt.s32.totalorder %s9, 2
    // Predicated region
    $region21: #{temporal_conv.1} parent=5 // pred_check
      %p125 = pneg %p124
    $region22: #{temporal_conv.1} parent=5 // pred_check_branch
      %127 = sbr.rel (%p125) target = $region24
    $region23: #{temporal_conv.1} parent=5 // pred_region
      // Predicated region
      $region25: #{temporal_conv.1} parent=23 // pred_check
        %p128 = pneg %p71
      $region26: #{temporal_conv.1} parent=23 // pred_check_branch
        %130 = sbr.rel (%p128) target = $region28
      $region27: #{temporal_conv.1} parent=23 // pred_region
        %p131 = scmp.lt.s32.totalorder %s9, 1
        %s132 = scalar_select %p131, %s9, 1
        %s133 = smul.addr %s132, 2
        %s134 = smul.addr %s133, 8
        %s135 = scalar_lea.vmem %s2, %s134
      $region28: #{temporal_conv.1} parent=23 // pred_fallthru
        _
    $region24: #{temporal_conv.1} parent=5 // pred_fallthru
      _
    %p136 = scmp.le.s32.totalorder 1, %s9
    %p137 = scmp.lt.s32.totalorder %s9, 3
    %p138 = pnand %p136, %p137
    %p139 = pneg %p138
    // Predicated region
    $region29: #{temporal_conv.1} parent=5 // pred_check
      _
    $region30: #{temporal_conv.1} parent=5 // pred_check_branch
      %141 = sbr.rel (%p138) target = $region32
    $region31: #{temporal_conv.1} parent=5 // pred_region
      %s142 = ssub.s32 %s9, 1
      %p143 = pneg %p30
      %p144 = pneg %p27
      %p145 = pneg %p51
      %p146 = pneg %p48
      %p147 = scmp.lt.s32.totalorder %s14, 1
      %s148 = scalar_select %p147, %s14, 1
      %s149 = smul.addr %s148, 2
      %s150 = smul.addr %s149, 8
      %s151 = scalar_lea.vmem %s2, %s150
      %p152 = pneg %p77
      %p153 = pneg %p74
      %p154 = pneg %p103
      %p155 = pneg %p100
      %p156 = scmp.lt.s32.totalorder %s14, 1
      %s157 = scalar_select %p156, %s14, 1
      %s158 = smul.addr %s157, 4
      %s159 = smul.addr %s158, 8
      %s160 = scalar_lea.vmem %s3, %s159
      %p161 = scmp.lt.s32.totalorder %s14, 1
      %s162 = scalar_select %p161, %s14, 1
      %s163 = smul.addr %s162, 2
      %s164 = smul.addr %s163, 8
      %s165 = scalar_lea.vmem %s2, %s164
      %p166 = scmp.lt.s32.totalorder %s14, 1
      %s167 = scalar_select %p166, %s14, 1
      %s168 = smul.addr %s167, 4
      %s169 = smul.addr %s168, 8
      %s170 = scalar_lea.vmem %s3, %s169
      %v171 = vld [vmem:[%s165] sm:$0xff]
      %v172 = vld [vmem:[%s165 + $0x8] sm:$0xff]
      %v173 = vld [vmem:[%s0] sm:$0xff]
      %v174 = vld [vmem:[%s0 + $0x8] sm:$0xff]
      %v175 = vld [vmem:[%s0 + $0x10] sm:$0xff]
      %v176 = vld [vmem:[%s0 + $0x18] sm:$0xff]
      %v177 = vld [vmem:[%s0 + $0x20] sm:$0xff]
      %v178 = vld [vmem:[%s0 + $0x28] sm:$0xff]
      %v179 = vld [vmem:[%s0 + $0x30] sm:$0xff]
      %v180 = vld [vmem:[%s0 + $0x38] sm:$0xff]
      %v181 = vld [vmem:[%s1] sm:$0x3]
      %v183 = vlaneseq
      %v184 = vshrl.u32 %v183, 7
      %v185 = vsub.s32 0, %v184
      %v186 = vrot.slane %v181, %v185
      %v187 = vlaneseq
      %v188 = vshrl.u32 %v187, 7
      %v189 = vsub.s32 1, %v188
      %v190 = vrot.slane %v181, %v189
      %vm193 = vcmask 261120
      %v195 = vsel %vm193, %v171, 0
      %v198 = vsel %vm193, %v172, 0
      %200 = vmatprep.subr.mxu0 0.0
      %201 = vmatpush1.msra.mxu0 0.0
      %202 = vmatprep.subr.mxu0 0.0
      %203 = vmatpush1.msra.mxu0 0.0
      %204 = vmatprep.subr.mxu0 0.0
      %205 = vmatpush1.msra.mxu0 0.0
      %206 = vmatprep.subr.mxu0 0.0
      %207 = vmatpush1.msra.mxu0 0.0
      %208 = vmatprep.subr.mxu0 0.0
      %209 = vmatpush1.msra.mxu0 0.0
      %210 = vmatprep.subr.mxu0 0.0
      %211 = vmatpush1.msra.mxu0 0.0
      %212 = vmatprep.subr.mxu0 0.0
      %213 = vmatpush1.msra.mxu0 0.0
      %214 = vmatprep.subr.mxu0 0.0
      %215 = vmatpush1.msra.mxu0 0.0
      %216 = vmatprep.subr.mxu0 0.0
      %217 = vmatpush1.msra.mxu0 0.0
      %218 = vmatprep.subr.mxu0 0.0
      %219 = vmatpush1.msra.mxu0 0.0
      %220 = vmatprep.subr.mxu0 0.0
      %221 = vmatpush1.msra.mxu0 0.0
      %222 = vmatprep.subr.mxu0 0.0
      %223 = vmatpush1.msra.mxu0 0.0
      %224 = vmatprep.subr.mxu0 %v180
      %225 = vmatpush1.msra.mxu0 %v179
      %226 = vmatprep.subr.mxu0 %v178
      %227 = vmatpush1.msra.mxu0 %v177
      %228 = vmatprep.subr.mxu0 %v176
      %229 = vmatpush1.msra.mxu0 %v175
      %230 = vmatprep.subr.mxu0 %v174
      %231 = vmatpush1.msra.mxu0 %v173
      %232 = vmatprep.subr.mxu0 0.0
      %233 = vmatpush2.msra.mxu0 0.0
      %234 = vmatprep.subr.mxu0 0.0
      %235 = vmatpush2.msra.mxu0 0.0
      %236 = vmatprep.subr.mxu0 0.0
      %237 = vmatpush2.msra.mxu0 0.0
      %238 = vmatprep.subr.mxu0 0.0
      %239 = vmatpush2.msra.mxu0 0.0
      %240 = vmatprep.subr.mxu0 0.0
      %241 = vmatpush2.msra.mxu0 0.0
      %242 = vmatprep.subr.mxu0 0.0
      %243 = vmatpush2.msra.mxu0 0.0
      %244 = vmatprep.subr.mxu0 0.0
      %245 = vmatpush2.msra.mxu0 0.0
      %246 = vmatprep.subr.mxu0 0.0
      %247 = vmatpush2.msra.mxu0 0.0
      %248 = vmatprep.subr.mxu0 0.0
      %249 = vmatpush2.msra.mxu0 0.0
      %250 = vmatprep.subr.mxu0 0.0
      %251 = vmatpush2.msra.mxu0 0.0
      %252 = vmatprep.subr.mxu0 0.0
      %253 = vmatpush2.msra.mxu0 0.0
      %254 = vmatprep.subr.mxu0 0.0
      %255 = vmatpush2.msra.mxu0 0.0
      %256 = vmatprep.subr.mxu0 0.0
      %257 = vmatpush2.msra.mxu0 0.0
      %258 = vmatprep.subr.mxu0 0.0
      %259 = vmatpush2.msra.mxu0 0.0
      %260 = vmatprep.subr.mxu0 0.0
      %261 = vmatpush2.msra.mxu0 0.0
      %262 = vmatprep.subr.mxu0 0.0
      %263 = vmatpush2.msra.mxu0 0.0
      %264 = vmatprep.mubr.f32.mxu0 0.0
      %265 = vmatmul.mubr.f32.gmra.mxu0 %v195
      %v266 = vpop.f32.mrf.mxu0
      %v267 = vadd.f32 %v186, %v266
      %v268 = vpop.f32.mrf.mxu0
      %v269 = vadd.f32 %v190, %v268
      %270 = vmatprep.mubr.f32.mxu0 0.0
      %271 = vmatmul.mubr.f32.gmra.mxu0 %v198
      %v272 = vpop.f32.mrf.mxu0
      %v273 = vadd.f32 %v186, %v272
      %v274 = vpop.f32.mrf.mxu0
      %v275 = vadd.f32 %v190, %v274
      %276 = vdwg.mxu0
      %s277 = scalar_lea.vmem %s0, 64
      %v278 = vld [vmem:[%s277] sm:$0xff]
      %v279 = vld [vmem:[%s277 + $0x8] sm:$0xff]
      %v280 = vld [vmem:[%s277 + $0x10] sm:$0xff]
      %v281 = vld [vmem:[%s277 + $0x18] sm:$0xff]
      %v282 = vld [vmem:[%s277 + $0x20] sm:$0xff]
      %v283 = vld [vmem:[%s277 + $0x28] sm:$0xff]
      %v284 = vld [vmem:[%s277 + $0x30] sm:$0xff]
      %v285 = vld [vmem:[%s277 + $0x38] sm:$0xff]
      %s286 = scalar_lea.vmem %s1, 2
      %v287 = vld [vmem:[%s286] sm:$0x3]
      %v289 = vlaneseq
      %v290 = vshrl.u32 %v289, 7
      %v291 = vsub.s32 0, %v290
      %v292 = vrot.slane %v287, %v291
      %v293 = vlaneseq
      %v294 = vshrl.u32 %v293, 7
      %v295 = vsub.s32 1, %v294
      %v296 = vrot.slane %v287, %v295
      %299 = vmatprep.subr.mxu0 0.0
      %300 = vmatpush1.msra.mxu0 0.0
      %301 = vmatprep.subr.mxu0 0.0
      %302 = vmatpush1.msra.mxu0 0.0
      %303 = vmatprep.subr.mxu0 0.0
      %304 = vmatpush1.msra.mxu0 0.0
      %305 = vmatprep.subr.mxu0 0.0
      %306 = vmatpush1.msra.mxu0 0.0
      %307 = vmatprep.subr.mxu0 0.0
      %308 = vmatpush1.msra.mxu0 0.0
      %309 = vmatprep.subr.mxu0 0.0
      %310 = vmatpush1.msra.mxu0 0.0
      %311 = vmatprep.subr.mxu0 0.0
      %312 = vmatpush1.msra.mxu0 0.0
      %313 = vmatprep.subr.mxu0 0.0
      %314 = vmatpush1.msra.mxu0 0.0
      %315 = vmatprep.subr.mxu0 0.0
      %316 = vmatpush1.msra.mxu0 0.0
      %317 = vmatprep.subr.mxu0 0.0
      %318 = vmatpush1.msra.mxu0 0.0
      %319 = vmatprep.subr.mxu0 0.0
      %320 = vmatpush1.msra.mxu0 0.0
      %321 = vmatprep.subr.mxu0 0.0
      %322 = vmatpush1.msra.mxu0 0.0
      %323 = vmatprep.subr.mxu0 %v285
      %324 = vmatpush1.msra.mxu0 %v284
      %325 = vmatprep.subr.mxu0 %v283
      %326 = vmatpush1.msra.mxu0 %v282
      %327 = vmatprep.subr.mxu0 %v281
      %328 = vmatpush1.msra.mxu0 %v280
      %329 = vmatprep.subr.mxu0 %v279
      %330 = vmatpush1.msra.mxu0 %v278
      %331 = vmatprep.subr.mxu0 0.0
      %332 = vmatpush2.msra.mxu0 0.0
      %333 = vmatprep.subr.mxu0 0.0
      %334 = vmatpush2.msra.mxu0 0.0
      %335 = vmatprep.subr.mxu0 0.0
      %336 = vmatpush2.msra.mxu0 0.0
      %337 = vmatprep.subr.mxu0 0.0
      %338 = vmatpush2.msra.mxu0 0.0
      %339 = vmatprep.subr.mxu0 0.0
      %340 = vmatpush2.msra.mxu0 0.0
      %341 = vmatprep.subr.mxu0 0.0
      %342 = vmatpush2.msra.mxu0 0.0
      %343 = vmatprep.subr.mxu0 0.0
      %344 = vmatpush2.msra.mxu0 0.0
      %345 = vmatprep.subr.mxu0 0.0
      %346 = vmatpush2.msra.mxu0 0.0
      %347 = vmatprep.subr.mxu0 0.0
      %348 = vmatpush2.msra.mxu0 0.0
      %349 = vmatprep.subr.mxu0 0.0
      %350 = vmatpush2.msra.mxu0 0.0
      %351 = vmatprep.subr.mxu0 0.0
      %352 = vmatpush2.msra.mxu0 0.0
      %353 = vmatprep.subr.mxu0 0.0
      %354 = vmatpush2.msra.mxu0 0.0
      %355 = vmatprep.subr.mxu0 0.0
      %356 = vmatpush2.msra.mxu0 0.0
      %357 = vmatprep.subr.mxu0 0.0
      %358 = vmatpush2.msra.mxu0 0.0
      %359 = vmatprep.subr.mxu0 0.0
      %360 = vmatpush2.msra.mxu0 0.0
      %361 = vmatprep.subr.mxu0 0.0
      %362 = vmatpush2.msra.mxu0 0.0
      %363 = vmatprep.mubr.f32.mxu0 0.0
      %364 = vmatmul.mubr.f32.gmra.mxu0 %v195
      %v365 = vpop.f32.mrf.mxu0
      %v366 = vadd.f32 %v292, %v365
      %v367 = vpop.f32.mrf.mxu0
      %v368 = vadd.f32 %v296, %v367
      %369 = vmatprep.mubr.f32.mxu0 0.0
      %370 = vmatmul.mubr.f32.gmra.mxu0 %v198
      %v371 = vpop.f32.mrf.mxu0
      %v372 = vadd.f32 %v292, %v371
      %v373 = vpop.f32.mrf.mxu0
      %v374 = vadd.f32 %v296, %v373
      %375 = vdwg.mxu0
      %s376 = scalar_lea.vmem %s0, 128
      %v377 = vld [vmem:[%s376] sm:$0xff]
      %v378 = vld [vmem:[%s376 + $0x8] sm:$0xff]
      %v379 = vld [vmem:[%s376 + $0x10] sm:$0xff]
      %v380 = vld [vmem:[%s376 + $0x18] sm:$0xff]
      %v381 = vld [vmem:[%s376 + $0x20] sm:$0xff]
      %v382 = vld [vmem:[%s376 + $0x28] sm:$0xff]
      %v383 = vld [vmem:[%s376 + $0x30] sm:$0xff]
      %v384 = vld [vmem:[%s376 + $0x38] sm:$0xff]
      %s385 = scalar_lea.vmem %s1, 4
      %v386 = vld [vmem:[%s385] sm:$0x3]
      %v388 = vlaneseq
      %v389 = vshrl.u32 %v388, 7
      %v390 = vsub.s32 0, %v389
      %v391 = vrot.slane %v386, %v390
      %v392 = vlaneseq
      %v393 = vshrl.u32 %v392, 7
      %v394 = vsub.s32 1, %v393
      %v395 = vrot.slane %v386, %v394
      %398 = vmatprep.subr.mxu0 0.0
      %399 = vmatpush1.msra.mxu0 0.0
      %400 = vmatprep.subr.mxu0 0.0
      %401 = vmatpush1.msra.mxu0 0.0
      %402 = vmatprep.subr.mxu0 0.0
      %403 = vmatpush1.msra.mxu0 0.0
      %404 = vmatprep.subr.mxu0 0.0
      %405 = vmatpush1.msra.mxu0 0.0
      %406 = vmatprep.subr.mxu0 0.0
      %407 = vmatpush1.msra.mxu0 0.0
      %408 = vmatprep.subr.mxu0 0.0
      %409 = vmatpush1.msra.mxu0 0.0
      %410 = vmatprep.subr.mxu0 0.0
      %411 = vmatpush1.msra.mxu0 0.0
      %412 = vmatprep.subr.mxu0 0.0
      %413 = vmatpush1.msra.mxu0 0.0
      %414 = vmatprep.subr.mxu0 0.0
      %415 = vmatpush1.msra.mxu0 0.0
      %416 = vmatprep.subr.mxu0 0.0
      %417 = vmatpush1.msra.mxu0 0.0
      %418 = vmatprep.subr.mxu0 0.0
      %419 = vmatpush1.msra.mxu0 0.0
      %420 = vmatprep.subr.mxu0 0.0
      %421 = vmatpush1.msra.mxu0 0.0
      %422 = vmatprep.subr.mxu0 %v384
      %423 = vmatpush1.msra.mxu0 %v383
      %424 = vmatprep.subr.mxu0 %v382
      %425 = vmatpush1.msra.mxu0 %v381
      %426 = vmatprep.subr.mxu0 %v380
      %427 = vmatpush1.msra.mxu0 %v379
      %428 = vmatprep.subr.mxu0 %v378
      %429 = vmatpush1.msra.mxu0 %v377
      %430 = vmatprep.subr.mxu0 0.0
      %431 = vmatpush2.msra.mxu0 0.0
      %432 = vmatprep.subr.mxu0 0.0
      %433 = vmatpush2.msra.mxu0 0.0
      %434 = vmatprep.subr.mxu0 0.0
      %435 = vmatpush2.msra.mxu0 0.0
      %436 = vmatprep.subr.mxu0 0.0
      %437 = vmatpush2.msra.mxu0 0.0
      %438 = vmatprep.subr.mxu0 0.0
      %439 = vmatpush2.msra.mxu0 0.0
      %440 = vmatprep.subr.mxu0 0.0
      %441 = vmatpush2.msra.mxu0 0.0
      %442 = vmatprep.subr.mxu0 0.0
      %443 = vmatpush2.msra.mxu0 0.0
      %444 = vmatprep.subr.mxu0 0.0
      %445 = vmatpush2.msra.mxu0 0.0
      %446 = vmatprep.subr.mxu0 0.0
      %447 = vmatpush2.msra.mxu0 0.0
      %448 = vmatprep.subr.mxu0 0.0
      %449 = vmatpush2.msra.mxu0 0.0
      %450 = vmatprep.subr.mxu0 0.0
      %451 = vmatpush2.msra.mxu0 0.0
      %452 = vmatprep.subr.mxu0 0.0
      %453 = vmatpush2.msra.mxu0 0.0
      %454 = vmatprep.subr.mxu0 0.0
      %455 = vmatpush2.msra.mxu0 0.0
      %456 = vmatprep.subr.mxu0 0.0
      %457 = vmatpush2.msra.mxu0 0.0
      %458 = vmatprep.subr.mxu0 0.0
      %459 = vmatpush2.msra.mxu0 0.0
      %460 = vmatprep.subr.mxu0 0.0
      %461 = vmatpush2.msra.mxu0 0.0
      %462 = vmatprep.mubr.f32.mxu0 0.0
      %463 = vmatmul.mubr.f32.gmra.mxu0 %v195
      %v464 = vpop.f32.mrf.mxu0
      %v465 = vadd.f32 %v391, %v464
      %v466 = vpop.f32.mrf.mxu0
      %v467 = vadd.f32 %v395, %v466
      %468 = vmatprep.mubr.f32.mxu0 0.0
      %469 = vmatmul.mubr.f32.gmra.mxu0 %v198
      %v470 = vpop.f32.mrf.mxu0
      %v471 = vadd.f32 %v391, %v470
      %v472 = vpop.f32.mrf.mxu0
      %v473 = vadd.f32 %v395, %v472
      %474 = vdwg.mxu0
      %v475 = vadd.f32 %v366, %v267
      %v476 = vadd.f32 %v368, %v269
      %v477 = vadd.f32 %v372, %v273
      %v478 = vadd.f32 %v374, %v275
      %v479 = vxor.u32 %v465, 2147483648
      %v480 = vxor.u32 %v467, 2147483648
      %v481 = vxor.u32 %v471, 2147483648
      %v482 = vxor.u32 %v473, 2147483648
      %v483 = vmul.f32 %v479, 1.442695
      %v484 = vpow.pop %v483
      %v485 = vmul.f32 %v480, 1.442695
      %v486 = vpow.pop %v485
      %v487 = vmul.f32 %v481, 1.442695
      %v488 = vpow.pop %v487
      %v489 = vmul.f32 %v482, 1.442695
      %v490 = vpow.pop %v489
      %v491 = vadd.f32 %v484, 1.0
      %v492 = vadd.f32 %v486, 1.0
      %v493 = vadd.f32 %v488, 1.0
      %v494 = vadd.f32 %v490, 1.0
      %v495 = vrcp.pop %v491
      %v496 = vmul.f32 1.0, %v495
      %v497 = vrcp.pop %v492
      %v498 = vmul.f32 1.0, %v497
      %v499 = vrcp.pop %v493
      %v500 = vmul.f32 1.0, %v499
      %v501 = vrcp.pop %v494
      %v502 = vmul.f32 1.0, %v501
      %v503 = vmul.f32 %v475, %v496
      %v504 = vmul.f32 %v476, %v498
      %v505 = vmul.f32 %v477, %v500
      %v506 = vmul.f32 %v478, %v502
      %507 = vst [vmem:[%s170] sm:$0xff] %v503
      %vm508 = vcmask 523264
      %509 = vst.msk [vmem:[%s170 + $0x8] sm:$0xff] %vm508, %v504
      %510 = vst [vmem:[%s170 + $0x10] sm:$0xff] %v505
      %511 = vst.msk [vmem:[%s170 + $0x18] sm:$0xff] %vm508, %v506
      %p512 = scmp.lt.s32.totalorder %s14, 1
      %s513 = scalar_select %p512, %s14, 1
      %s514 = smul.addr %s513, 4
      %s515 = smul.addr %s514, 8
      %s516 = scalar_lea.vmem %s3, %s515
      // Predicated region
      $region33: #{temporal_conv.1} parent=31 // pred_check
        %p517 = pneg %p100
      $region34: #{temporal_conv.1} parent=31 // pred_check_branch
        %519 = sbr.rel (%p517) target = $region36
      $region35: #{temporal_conv.1} parent=31 // pred_region
        _
      $region36: #{temporal_conv.1} parent=31 // pred_fallthru
        _
    $region32: #{temporal_conv.1} parent=5 // pred_fallthru
      _
    %p520 = scmp.le.s32.totalorder 2, %s9
    // Predicated region
    $region37: #{temporal_conv.1} parent=5 // pred_check
      %p521 = pneg %p520
    $region38: #{temporal_conv.1} parent=5 // pred_check_branch
      %523 = sbr.rel (%p521) target = $region40
    $region39: #{temporal_conv.1} parent=5 // pred_region
      %s524 = ssub.s32 %s9, 2
      // Predicated region
      $region41: #{temporal_conv.1} parent=39 // pred_check
        %p525 = pneg %p106
      $region42: #{temporal_conv.1} parent=39 // pred_check_branch
        %527 = sbr.rel (%p525) target = $region44
      $region43: #{temporal_conv.1} parent=39 // pred_region
        %p528 = scmp.lt.s32.totalorder %s15, 1
        %s529 = scalar_select %p528, %s15, 1
        %s530 = smul.addr %s529, 4
        %s531 = smul.addr %s530, 8
        %s532 = scalar_lea.vmem %s3, %s531
      $region44: #{temporal_conv.1} parent=39 // pred_fallthru
        _
    $region40: #{temporal_conv.1} parent=5 // pred_fallthru
      _
  $region6: #{temporal_conv.1} parent=0 // loop_footer
    %s13 = sadd.s32 1, %s9
  $region7: #{temporal_conv.1} parent=0 // loop_footer_branch
    %8 = sbr.rel target = $region3
  $region8: #{temporal_conv.1} parent=0 // loop_exit
    _

</llo_original>
